<compile_context>
chip_gen: v5e
topology: v5e:2x2
jax: 0.10.0
libtpu: 0.0.40
codegen_flags: <defaults>
</compile_context>

<pallas_src>
import functools

import jax
import jax.numpy as jnp
from jax.experimental import pallas as pl
from jax.experimental.pallas import tpu as pltpu


def _round_up(x: int, m: int) -> int:
    return ((x + m - 1) // m) * m


def _sublane_pack(dtype) -> int:
    # Rows per sublane group for the pred dtype (min legal row-tile multiple).
    return {4: 8, 2: 16, 1: 32}.get(jnp.dtype(dtype).itemsize, 8)


def _choose_class_chunk(c: int, max_chunk: int = 2048) -> int:
    """Class chunk must exactly tile C (no column masking in the kernel) and be
    lane-aligned; otherwise fall back to a single full-C block."""
    if c <= max_chunk:
        return c
    for tc in (2048, 1024, 512, 256, 128):
        if c % tc == 0:
            return tc
    return c


def _label_smoothing_kernel(pred_ref, target_ref, w_ref, loss_ref, wsum_ref,
                            m_sc, s_sc, sumx_sc, xt_sc,
                            *, smoothing: float, classes: int, n_rows: int,
                            tile_rows: int, tile_cols: int):
    i = pl.program_id(0)   # row-tile index   ("parallel")
    j = pl.program_id(1)   # class-chunk index ("arbitrary", innermost)

    @pl.when(j == 0)
    def _init():
        m_sc[...] = jnp.full_like(m_sc, -jnp.inf)
        s_sc[...] = jnp.zeros_like(s_sc)
        sumx_sc[...] = jnp.zeros_like(sumx_sc)
        xt_sc[...] = jnp.zeros_like(xt_sc)

    # Per-tile cast to f32 (pred may be bf16 in HBM).  No validity pre-mask:
    # garbage in padded rows stays row-local and is dropped by the selects in
    # the finalize step.
    x = pred_ref[...].astype(jnp.float32)                         # (TN, TC)

    # Streaming (online) log-softmax statistics.
    m_prev = m_sc[...]                                            # (TN, 1)
    m_new = jnp.maximum(m_prev, jnp.max(x, axis=-1, keepdims=True))
    alpha = jnp.exp(m_prev - m_new)
    s_sc[...] = alpha * s_sc[...] + jnp.sum(jnp.exp(x - m_new), axis=-1,
                                            keepdims=True)
    m_sc[...] = m_new
    sumx_sc[...] += jnp.sum(x, axis=-1, keepdims=True)

    # Target logit gathered via a lane mask within this class chunk.
    col = j * tile_cols + jax.lax.broadcasted_iota(jnp.int32, x.shape, 1)
    is_tgt = col == target_ref[...]                               # (TN, TC)
    xt_sc[...] += jnp.sum(jnp.where(is_tgt, x, 0.0), axis=-1, keepdims=True)

    @pl.when(j == pl.num_programs(1) - 1)
    def _finalize():
        confidence = 1.0 - smoothing
        smooth_val = smoothing / (classes - 1)

        lse = m_sc[...] + jnp.log(s_sc[...])                      # (TN, 1)
        # sum_c logp = sum_c x - C * lse ;  logp_t = x_t - lse
        sum_logp = sumx_sc[...] - classes * lse
        logp_t = xt_sc[...] - lse
        w = w_ref[...]                                            # (TN, 1)

        row_loss = -(smooth_val * sum_logp
                     + (confidence - smooth_val) * logp_t) * w    # (TN, 1)

        # Mask padded rows at the N boundary (select: NaN/Inf cannot leak).
        row_ids = i * tile_rows + jax.lax.broadcasted_iota(
            jnp.int32, (tile_rows, 1), 0)
        valid = row_ids < n_rows

        loss_ref[...] = jnp.sum(jnp.where(valid, row_loss, 0.0)).reshape(1, 1, 1)
        wsum_ref[...] = jnp.sum(jnp.where(valid, w, 0.0)).reshape(1, 1, 1)


def label_smoothing_loss(pred, target, weight=None, *, smoothing: float,
                         tile_rows=None, class_chunk=None):
    """pred: (N, C) float (any fp dtype), target: (N,) int, weight: (C,) or None."""
    n, c = pred.shape
    assert c > 1, "label smoothing undefined for a single class (C-1 == 0)"

    if weight is None:
        weight = jnp.ones((c,), dtype=jnp.float32)
    weight = weight.astype(jnp.float32)
    target = target.astype(jnp.int32)
    target2d = target.reshape(n, 1)
    # Gather per-row class weight once here (N f32 values) instead of an
    # in-kernel (TN, C) select + class reduction.
    w2d = weight[target].reshape(n, 1)

    itemsize = jnp.dtype(pred.dtype).itemsize
    pack = _sublane_pack(pred.dtype)

    # Class chunk (lane axis) and row tile (sublane axis) from a VMEM budget:
    # pred is double-buffered, so budget ~ 2 * TN * TC * itemsize.
    tc = class_chunk if class_chunk is not None else _choose_class_chunk(c)
    assert c % tc == 0, "class chunk must tile C exactly"

    vmem_limit = 48 * 1024 * 1024       # headroom on v7x (64 MiB physical VMEM)
    pred_budget = vmem_limit // 2
    if tile_rows is None:
        tn = pred_budget // (2 * tc * itemsize)
        tn = max(pack, min(1024, (tn // pack) * pack))
    else:
        tn = _round_up(int(tile_rows), pack)
    tn = max(pack, min(tn, _round_up(n, pack)))

    grid = (pl.cdiv(n, tn), pl.cdiv(c, tc))

    kernel = functools.partial(
        _label_smoothing_kernel, smoothing=float(smoothing), classes=c,
        n_rows=n, tile_rows=tn, tile_cols=tc)

    loss_parts, w_parts = pl.pallas_call(
        kernel,
        out_shape=(jax.ShapeDtypeStruct((grid[0], 1, 1), jnp.float32),
                   jax.ShapeDtypeStruct((grid[0], 1, 1), jnp.float32)),
        grid_spec=pltpu.PrefetchScalarGridSpec(
            num_scalar_prefetch=0,
            grid=grid,
            in_specs=[
                pl.BlockSpec((tn, tc), lambda i, j: (i, j)),   # pred (native dtype)
                pl.BlockSpec((tn, 1), lambda i, j: (i, 0)),    # target
                pl.BlockSpec((tn, 1), lambda i, j: (i, 0)),    # weight[target]
            ],
            out_specs=(
                pl.BlockSpec((1, 1, 1), lambda i, j: (i, 0, 0)),   # loss partials
                pl.BlockSpec((1, 1, 1), lambda i, j: (i, 0, 0)),   # weight partials
            ),
            scratch_shapes=[pltpu.VMEM((tn, 1), jnp.float32)] * 4,
        ),
        compiler_params=pltpu.CompilerParams(
            dimension_semantics=("parallel", "arbitrary"),
            vmem_limit_bytes=vmem_limit),
        cost_estimate=pl.CostEstimate(
            flops=10 * n * c,
            transcendentals=n * c,
            bytes_accessed=n * c * itemsize + n * 8 + 8 * grid[0]),
    )(pred, target2d, w2d)

    # mean(weighted_loss) * N / sum(w)  ==  sum(weighted_loss) / sum(w)
    return jnp.sum(loss_parts) / jnp.sum(w_parts)


def _reference(pred, target, weight, *, smoothing: float):
    """Pure-JAX reference mirroring the PyTorch forward."""
    n, c = pred.shape
    confidence = 1.0 - smoothing
    logp = jax.nn.log_softmax(pred.astype(jnp.float32), axis=-1)
    true_dist = jnp.full((n, c), smoothing / (c - 1), dtype=jnp.float32)
    true_dist = true_dist.at[jnp.arange(n), target].set(confidence)
    w = weight[target]
    weighted_loss = jnp.sum(-true_dist * logp, axis=-1) * w
    return jnp.mean(weighted_loss) * w.size / jnp.sum(w)


if __name__ == "__main__":
    smoothing = 0.1
    N, C = 12, 256   # N not a multiple of the row tile; C split into 2 chunks

    key = jax.random.PRNGKey(0)
    kp, kt = jax.random.split(key)
    pred = jax.random.normal(kp, (N, C), dtype=jnp.float32)
    target = jax.random.randint(kt, (N,), 0, C, dtype=jnp.int32)
    weight = jnp.linspace(0.5, 1.5, C, dtype=jnp.float32)

    # Forced small tiles: grid (2 row tiles x 2 class chunks) exercises both the
    # streaming log-softmax carry and the partial last row tile.
    out = label_smoothing_loss(pred, target, weight, smoothing=smoothing,
                               tile_rows=8, class_chunk=128)
    out = jax.block_until_ready(out)
    ref = _reference(pred, target, weight, smoothing=smoothing)
    assert jnp.allclose(out, ref, rtol=1e-4, atol=1e-5), (out, ref)

    # Default path: weight=None, bf16 logits, auto tile selection (single block).
    pred_bf16 = pred.astype(jnp.bfloat16)
    out2 = jax.block_until_ready(
        label_smoothing_loss(pred_bf16, target, None, smoothing=smoothing))
    ref2 = _reference(pred_bf16.astype(jnp.float32), target,
                      jnp.ones((C,), jnp.float32), smoothing=smoothing)
    assert jnp.allclose(out2, ref2, rtol=1e-4, atol=1e-4), (out2, ref2)

    print("KERNEL_OK")
</pallas_src>

<mosaic_0001>
module attributes {stable_mosaic.version = 11 : i64} {
  func.func @_label_smoothing_kernel(%arg0: i32, %arg1: i32, %arg2: memref<8x128xf32, #tpu.memory_space<vmem>>, %arg3: memref<8x1xi32, #tpu.memory_space<vmem>>, %arg4: memref<8x1xf32, #tpu.memory_space<vmem>>, %arg5: memref<1x1x1xf32, #tpu.memory_space<vmem>>, %arg6: memref<1x1x1xf32, #tpu.memory_space<vmem>>, %arg7: memref<8x1xf32, #tpu.memory_space<vmem>>, %arg8: memref<8x1xf32, #tpu.memory_space<vmem>>, %arg9: memref<8x1xf32, #tpu.memory_space<vmem>>, %arg10: memref<8x1xf32, #tpu.memory_space<vmem>>) attributes {dimension_semantics = [#tpu.dimension_semantics<parallel>, #tpu.dimension_semantics<arbitrary>], iteration_bounds = array<i64: 2, 2>, scalar_prefetch = 0 : i64, scratch_operands = 4 : i64, tpu.core_type = #tpu.core_type<tc>, window_params = [{transform_indices = @transform_0, window_bounds = array<i64: 8, 128>}, {transform_indices = @transform_1, window_bounds = array<i64: 8, 1>}, {transform_indices = @transform_2, window_bounds = array<i64: 8, 1>}, {transform_indices = @transform_3, window_bounds = array<i64: 1, 1, 1>}, {transform_indices = @transform_4, window_bounds = array<i64: 1, 1, 1>}]} {
    %c0_i32 = arith.constant 0 : i32
    %0 = arith.cmpi eq, %arg1, %c0_i32 : i32
    %1 = arith.extui %0 : i1 to i32
    %c0_i32_0 = arith.constant 0 : i32
    %2 = arith.cmpi ne, %1, %c0_i32_0 : i32
    scf.if %2 {
      %cst_25 = arith.constant 0xFF800000 : f32
      %42 = vector.broadcast %cst_25 : f32 to vector<8x1xf32>
      %c0_26 = arith.constant 0 : index
      %c0_27 = arith.constant 0 : index
      %43 = vector.load %arg7[%c0_26, %c0_27] : memref<8x1xf32, #tpu.memory_space<vmem>>, vector<8x1xf32>
      tpu.vector_store %arg7[%c0_26, %c0_27], %42 {strides = array<i32>} : memref<8x1xf32, #tpu.memory_space<vmem>>, vector<8x1xf32>,
      %cst_28 = arith.constant 0.000000e+00 : f32
      %44 = vector.broadcast %cst_28 : f32 to vector<8x1xf32>
      %c0_29 = arith.constant 0 : index
      %c0_30 = arith.constant 0 : index
      %45 = vector.load %arg8[%c0_29, %c0_30] : memref<8x1xf32, #tpu.memory_space<vmem>>, vector<8x1xf32>
      tpu.vector_store %arg8[%c0_29, %c0_30], %44 {strides = array<i32>} : memref<8x1xf32, #tpu.memory_space<vmem>>, vector<8x1xf32>,
      %cst_31 = arith.constant 0.000000e+00 : f32
      %46 = vector.broadcast %cst_31 : f32 to vector<8x1xf32>
      %c0_32 = arith.constant 0 : index
      %c0_33 = arith.constant 0 : index
      %47 = vector.load %arg9[%c0_32, %c0_33] : memref<8x1xf32, #tpu.memory_space<vmem>>, vector<8x1xf32>
      tpu.vector_store %arg9[%c0_32, %c0_33], %46 {strides = array<i32>} : memref<8x1xf32, #tpu.memory_space<vmem>>, vector<8x1xf32>,
      %cst_34 = arith.constant 0.000000e+00 : f32
      %48 = vector.broadcast %cst_34 : f32 to vector<8x1xf32>
      %c0_35 = arith.constant 0 : index
      %c0_36 = arith.constant 0 : index
      %49 = vector.load %arg10[%c0_35, %c0_36] : memref<8x1xf32, #tpu.memory_space<vmem>>, vector<8x1xf32>
      tpu.vector_store %arg10[%c0_35, %c0_36], %48 {strides = array<i32>} : memref<8x1xf32, #tpu.memory_space<vmem>>, vector<8x1xf32>,
    } else {
    }
    %c0 = arith.constant 0 : index
    %c0_1 = arith.constant 0 : index
    %3 = vector.load %arg2[%c0, %c0_1] : memref<8x128xf32, #tpu.memory_space<vmem>>, vector<8x128xf32>
    %c0_2 = arith.constant 0 : index
    %c0_3 = arith.constant 0 : index
    %4 = vector.load %arg7[%c0_2, %c0_3] : memref<8x1xf32, #tpu.memory_space<vmem>>, vector<8x1xf32>
    %cst = arith.constant dense<0xFF800000> : vector<8xf32>
    %5 = vector.multi_reduction <maximumf>, %3, %cst [1] : vector<8x128xf32> to vector<8xf32>
    %6 = vector.shape_cast %5 : vector<8xf32> to vector<8x1xf32>
    %7 = arith.maximumf %4, %6 : vector<8x1xf32>
    %8 = arith.subf %4, %7 : vector<8x1xf32>
    %9 = math.exp %8 : vector<8x1xf32>
    %c0_4 = arith.constant 0 : index
    %c0_5 = arith.constant 0 : index
    %10 = vector.load %arg8[%c0_4, %c0_5] : memref<8x1xf32, #tpu.memory_space<vmem>>, vector<8x1xf32>
    %11 = arith.mulf %9, %10 : vector<8x1xf32>
    %12 = vector.broadcast %7 : vector<8x1xf32> to vector<8x128xf32>
    %13 = arith.subf %3, %12 : vector<8x128xf32>
    %14 = math.exp %13 : vector<8x128xf32>
    %cst_6 = arith.constant dense<0.000000e+00> : vector<8xf32>
    %15 = vector.multi_reduction <add>, %14, %cst_6 [1] : vector<8x128xf32> to vector<8xf32>
    %16 = vector.shape_cast %15 : vector<8xf32> to vector<8x1xf32>
    %17 = arith.addf %11, %16 : vector<8x1xf32>
    %c0_7 = arith.constant 0 : index
    %c0_8 = arith.constant 0 : index
    %18 = vector.load %arg8[%c0_7, %c0_8] : memref<8x1xf32, #tpu.memory_space<vmem>>, vector<8x1xf32>
    tpu.vector_store %arg8[%c0_7, %c0_8], %17 {strides = array<i32>} : memref<8x1xf32, #tpu.memory_space<vmem>>, vector<8x1xf32>,
    %c0_9 = arith.constant 0 : index
    %c0_10 = arith.constant 0 : index
    %19 = vector.load %arg7[%c0_9, %c0_10] : memref<8x1xf32, #tpu.memory_space<vmem>>, vector<8x1xf32>
    tpu.vector_store %arg7[%c0_9, %c0_10], %7 {strides = array<i32>} : memref<8x1xf32, #tpu.memory_space<vmem>>, vector<8x1xf32>,
    %c0_11 = arith.constant 0 : index
    %c0_12 = arith.constant 0 : index
    %20 = vector.load %arg9[%c0_11, %c0_12] : memref<8x1xf32, #tpu.memory_space<vmem>>, vector<8x1xf32>
    %cst_13 = arith.constant dense<0.000000e+00> : vector<8xf32>
    %21 = vector.multi_reduction <add>, %3, %cst_13 [1] : vector<8x128xf32> to vector<8xf32>
    %22 = vector.shape_cast %21 : vector<8xf32> to vector<8x1xf32>
    %23 = arith.addf %20, %22 : vector<8x1xf32>
    %c0_14 = arith.constant 0 : index
    %c0_15 = arith.constant 0 : index
    %24 = vector.load %arg9[%c0_14, %c0_15] : memref<8x1xf32, #tpu.memory_space<vmem>>, vector<8x1xf32>
    tpu.vector_store %arg9[%c0_14, %c0_15], %23 {strides = array<i32>} : memref<8x1xf32, #tpu.memory_space<vmem>>, vector<8x1xf32>,
    %c128_i32 = arith.constant 128 : i32
    %25 = arith.muli %arg1, %c128_i32 : i32
    %26 = tpu.iota {dimensions = array<i32: 1>} : vector<8x128xi32>
    %27 = vector.broadcast %25 : i32 to vector<8x128xi32>
    %28 = arith.addi %27, %26 : vector<8x128xi32>
    %c0_16 = arith.constant 0 : index
    %c0_17 = arith.constant 0 : index
    %29 = vector.load %arg3[%c0_16, %c0_17] : memref<8x1xi32, #tpu.memory_space<vmem>>, vector<8x1xi32>
    %30 = vector.broadcast %29 : vector<8x1xi32> to vector<8x128xi32>
    %31 = arith.cmpi eq, %28, %30 : vector<8x128xi32>
    %c0_18 = arith.constant 0 : index
    %c0_19 = arith.constant 0 : index
    %32 = vector.load %arg10[%c0_18, %c0_19] : memref<8x1xf32, #tpu.memory_space<vmem>>, vector<8x1xf32>
    %cst_20 = arith.constant 0.000000e+00 : f32
    %33 = vector.broadcast %cst_20 : f32 to vector<8x128xf32>
    %34 = arith.select %31, %3, %33 : vector<8x128xi1>, vector<8x128xf32>
    %cst_21 = arith.constant dense<0.000000e+00> : vector<8xf32>
    %35 = vector.multi_reduction <add>, %34, %cst_21 [1] : vector<8x128xf32> to vector<8xf32>
    %36 = vector.shape_cast %35 : vector<8xf32> to vector<8x1xf32>
    %37 = arith.addf %32, %36 : vector<8x1xf32>
    %c0_22 = arith.constant 0 : index
    %c0_23 = arith.constant 0 : index
    %38 = vector.load %arg10[%c0_22, %c0_23] : memref<8x1xf32, #tpu.memory_space<vmem>>, vector<8x1xf32>
    tpu.vector_store %arg10[%c0_22, %c0_23], %37 {strides = array<i32>} : memref<8x1xf32, #tpu.memory_space<vmem>>, vector<8x1xf32>,
    %c1_i32 = arith.constant 1 : i32
    %39 = arith.cmpi eq, %arg1, %c1_i32 : i32
    %40 = arith.extui %39 : i1 to i32
    %c0_i32_24 = arith.constant 0 : i32
    %41 = arith.cmpi ne, %40, %c0_i32_24 : i32
    scf.if %41 {
      %c0_25 = arith.constant 0 : index
      %c0_26 = arith.constant 0 : index
      %42 = vector.load %arg7[%c0_25, %c0_26] : memref<8x1xf32, #tpu.memory_space<vmem>>, vector<8x1xf32>
      %c0_27 = arith.constant 0 : index
      %c0_28 = arith.constant 0 : index
      %43 = vector.load %arg8[%c0_27, %c0_28] : memref<8x1xf32, #tpu.memory_space<vmem>>, vector<8x1xf32>
      %44 = math.log %43 : vector<8x1xf32>
      %45 = arith.addf %42, %44 : vector<8x1xf32>
      %c0_29 = arith.constant 0 : index
      %c0_30 = arith.constant 0 : index
      %46 = vector.load %arg9[%c0_29, %c0_30] : memref<8x1xf32, #tpu.memory_space<vmem>>, vector<8x1xf32>
      %cst_31 = arith.constant 2.560000e+02 : f32
      %47 = vector.broadcast %cst_31 : f32 to vector<8x1xf32>
      %48 = arith.mulf %47, %45 : vector<8x1xf32>
      %49 = arith.subf %46, %48 : vector<8x1xf32>
      %c0_32 = arith.constant 0 : index
      %c0_33 = arith.constant 0 : index
      %50 = vector.load %arg10[%c0_32, %c0_33] : memref<8x1xf32, #tpu.memory_space<vmem>>, vector<8x1xf32>
      %51 = arith.subf %50, %45 : vector<8x1xf32>
      %c0_34 = arith.constant 0 : index
      %c0_35 = arith.constant 0 : index
      %52 = vector.load %arg4[%c0_34, %c0_35] : memref<8x1xf32, #tpu.memory_space<vmem>>, vector<8x1xf32>
      %cst_36 = arith.constant 3.92156857E-4 : f32
      %53 = vector.broadcast %cst_36 : f32 to vector<8x1xf32>
      %54 = arith.mulf %53, %49 : vector<8x1xf32>
      %cst_37 = arith.constant 0.899607837 : f32
      %55 = vector.broadcast %cst_37 : f32 to vector<8x1xf32>
      %56 = arith.mulf %55, %51 : vector<8x1xf32>
      %57 = arith.addf %54, %56 : vector<8x1xf32>
      %cst_38 = arith.constant 0.000000e+00 : f32
      %58 = vector.broadcast %cst_38 : f32 to vector<8x1xf32>
      %59 = arith.subf %58, %57 : vector<8x1xf32>
      %60 = arith.mulf %59, %52 : vector<8x1xf32>
      %c8_i32 = arith.constant 8 : i32
      %61 = arith.muli %arg0, %c8_i32 : i32
      %62 = tpu.iota {dimensions = array<i32: 0>} : vector<8x1xi32>
      %63 = vector.broadcast %61 : i32 to vector<8x1xi32>
      %64 = arith.addi %63, %62 : vector<8x1xi32>
      %c12_i32 = arith.constant 12 : i32
      %65 = vector.broadcast %c12_i32 : i32 to vector<8x1xi32>
      %66 = arith.cmpi slt, %64, %65 : vector<8x1xi32>
      %cst_39 = arith.constant 0.000000e+00 : f32
      %67 = vector.broadcast %cst_39 : f32 to vector<8x1xf32>
      %68 = arith.select %66, %60, %67 : vector<8x1xi1>, vector<8x1xf32>
      %69 = vector.shape_cast %68 : vector<8x1xf32> to vector<1x8x1xf32>
      %cst_40 = arith.constant dense<0.000000e+00> : vector<1xf32>
      %70 = vector.multi_reduction <add>, %69, %cst_40 [1, 2] : vector<1x8x1xf32> to vector<1xf32>
      %71 = vector.shape_cast %70 : vector<1xf32> to vector<1x1x1xf32>
      %72 = vector.extract %71[0, 0, 0] : f32 from vector<1x1x1xf32>
      %73 = vector.broadcast %72 : f32 to vector<1x1x1xf32>
      %c0_41 = arith.constant 0 : index
      %c0_42 = arith.constant 0 : index
      %c0_43 = arith.constant 0 : index
      %74 = vector.load %arg5[%c0_41, %c0_42, %c0_43] : memref<1x1x1xf32, #tpu.memory_space<vmem>>, vector<1x1x1xf32>
      tpu.vector_store %arg5[%c0_41, %c0_42, %c0_43], %73 {strides = array<i32>} : memref<1x1x1xf32, #tpu.memory_space<vmem>>, vector<1x1x1xf32>,
      %cst_44 = arith.constant 0.000000e+00 : f32
      %75 = vector.broadcast %cst_44 : f32 to vector<8x1xf32>
      %76 = arith.select %66, %52, %75 : vector<8x1xi1>, vector<8x1xf32>
      %77 = vector.shape_cast %76 : vector<8x1xf32> to vector<1x8x1xf32>
      %cst_45 = arith.constant dense<0.000000e+00> : vector<1xf32>
      %78 = vector.multi_reduction <add>, %77, %cst_45 [1, 2] : vector<1x8x1xf32> to vector<1xf32>
      %79 = vector.shape_cast %78 : vector<1xf32> to vector<1x1x1xf32>
      %80 = vector.extract %79[0, 0, 0] : f32 from vector<1x1x1xf32>
      %81 = vector.broadcast %80 : f32 to vector<1x1x1xf32>
      %c0_46 = arith.constant 0 : index
      %c0_47 = arith.constant 0 : index
      %c0_48 = arith.constant 0 : index
      %82 = vector.load %arg6[%c0_46, %c0_47, %c0_48] : memref<1x1x1xf32, #tpu.memory_space<vmem>>, vector<1x1x1xf32>
      tpu.vector_store %arg6[%c0_46, %c0_47, %c0_48], %81 {strides = array<i32>} : memref<1x1x1xf32, #tpu.memory_space<vmem>>, vector<1x1x1xf32>,
    } else {
    }
    return
  }
  func.func @transform_0(%arg0: i32, %arg1: i32) -> (i32, i32) {
    %c0_i32 = arith.constant 0 : i32
    return %arg0, %arg1 : i32, i32
  }
  func.func @transform_1(%arg0: i32, %arg1: i32) -> (i32, i32) {
    %c0_i32 = arith.constant 0 : i32
    %c0_i32_0 = arith.constant 0 : i32
    return %arg0, %c0_i32 : i32, i32
  }
  func.func @transform_2(%arg0: i32, %arg1: i32) -> (i32, i32) {
    %c0_i32 = arith.constant 0 : i32
    %c0_i32_0 = arith.constant 0 : i32
    return %arg0, %c0_i32 : i32, i32
  }
  func.func @transform_3(%arg0: i32, %arg1: i32) -> (i32, i32, i32) {
    %c0_i32 = arith.constant 0 : i32
    %c0_i32_0 = arith.constant 0 : i32
    %c0_i32_1 = arith.constant 0 : i32
    return %arg0, %c0_i32, %c0_i32_0 : i32, i32, i32
  }
  func.func @transform_4(%arg0: i32, %arg1: i32) -> (i32, i32, i32) {
    %c0_i32 = arith.constant 0 : i32
    %c0_i32_0 = arith.constant 0 : i32
    %c0_i32_1 = arith.constant 0 : i32
    return %arg0, %c0_i32, %c0_i32_0 : i32, i32, i32
  }
}

</mosaic_0001>

<llo_original>
// kernel: tpu_custom_call.1
$region0: #{tpu_custom_call.1}
  #allocation0 [shape = 'u32[]', space=smem, size = 0x4, offset = 0x4, fixed_abs, tag = 'smem constant byte address 0x4 - core index']
  #allocation1 [shape = 'u32[72,128]{1,0:T(1,128)}', space=vmem, size = 0x9000, scoped, tag = 'internal scratch']
  #allocation2 [shape = 'f32[8,1]{1,0:T(8,128)}', space=vmem, size = 0x1000, scoped, tag = 'scratch operand']
  #allocation3 [shape = 'f32[8,1]{1,0:T(8,128)}', space=vmem, size = 0x1000, scoped, tag = 'scratch operand']
  #allocation4 [shape = 'f32[8,1]{1,0:T(8,128)}', space=vmem, size = 0x1000, scoped, tag = 'scratch operand']
  #allocation5 [shape = 'f32[8,1]{1,0:T(8,128)}', space=vmem, size = 0x1000, scoped, tag = 'scratch operand']
  %s0 = inlined_call_operand.vmem [shape: f32[12,256], index: 0, kind: input, shape index: {}]
  %s1 = inlined_call_operand.vmem [shape: s32[12,1], index: 1, kind: input, shape index: {}]
  %s2 = inlined_call_operand.vmem [shape: f32[12,1], index: 2, kind: input, shape index: {}]
  %s3 = inlined_call_operand.vmem [shape: f32[2,1,1], index: 3, kind: output, shape index: {0}]
  %s4 = inlined_call_operand.vmem [shape: f32[2,1,1], index: 4, kind: output, shape index: {1}]
  %5 = xla_tuple %s3, %s4
  %s6 = sld [smem:[#allocation0]]
  $region61: #{tpu_custom_call.1} parent=0
    _
  %s8 = ssub.s32 1, %s6
  %s9 = scalar_select 0, %s8, %s6
  loop: start=0, step=1, limit=6
  $region2: #{tpu_custom_call.1} parent=0 // loop_pre_header
    _
  $region3: #{tpu_custom_call.1} parent=0 // loop_header
    %s11 = sphi 0, %s15
    %p12 = scmp.ge.s32.totalorder %s11, 6
    %s18 = sphi 0, %s30
    %s19 = sphi 0, %s26
    %s20 = sphi 0, %s18
    %s21 = sphi 0, %s19
    %s22 = sphi 0, %s20
    %s23 = sphi 0, %s21
    %s35 = sphi 0, %s37
    %s38 = sphi 0, %s35
    %s39 = sphi 0, %s38
    %s55 = sphi 0, %s39
    %s61 = sphi 0, %s63
    %s64 = sphi 0, %s61
    %s65 = sphi 0, %s64
    %s81 = sphi 0, %s65
    %s87 = sphi 0, %s89
    %s90 = sphi 0, %s87
    %s91 = sphi 0, %s90
    %s107 = sphi 0, %s91
    %s113 = sphi 0, %s115
    %s116 = sphi 0, %s113
    %s117 = sphi 0, %s116
    %s133 = sphi 0, %s117
    %s139 = sphi 0, %s141
    %s142 = sphi 0, %s139
    %s143 = sphi 0, %s142
    %s159 = sphi 0, %s143
  $region4: #{tpu_custom_call.1} parent=0 // loop_header_branch
    %14 = sbr.rel (%p12) target = $region8
  $region5: #{tpu_custom_call.1} parent=0 // loop_body
    %s16 = ssub.s32 %s11, 1
    %s17 = ssub.s32 %s11, 2
    %s24 = sadd.s32 1, %s19
    %p25 = scmp.ge.s32.totalorder %s24, 2
    %s26 = scalar_select %p25, 0, %s24
    %s27 = sadd.s32 1, %s18
    %s28 = scalar_select %p25, %s27, %s18
    %p29 = scmp.ge.s32.totalorder %s28, 2
    %s30 = scalar_select %p29, 0, %s28
    %s31 = ssub.s32 %s18, %s30
    %s32 = ssub.s32 %s19, %s26
    %s33 = sor.u32 %s31, %s32
    %p34 = scmp.eq.s32.totalorder %s33, 0
    %s36 = sadd.s32 %s35, 1
    %s37 = scalar_select %p34, %s35, %s36
    %p40 = pneg %p34
    %p41 = scmp.eq.s32.totalorder %s11, 3
    %p42 = por %p40, %p41
    %p43 = scmp.ne.s32.totalorder %s35, %s38
    %p44 = scmp.eq.s32.totalorder %s11, 0
    %p45 = por %p43, %p44
    %p46 = scmp.ne.s32.totalorder %s35, %s38
    %p47 = scmp.eq.s32.totalorder %s16, 3
    %p48 = por %p46, %p47
    %p49 = scmp.ne.s32.totalorder %s38, %s39
    %p50 = scmp.eq.s32.totalorder %s16, 0
    %p51 = por %p49, %p50
    %p52 = scmp.ne.s32.totalorder %s38, %s39
    %p53 = scmp.eq.s32.totalorder %s17, 3
    %p54 = por %p52, %p53
    %p56 = scmp.ne.s32.totalorder %s39, %s55
    %p57 = scmp.eq.s32.totalorder %s17, 0
    %p58 = por %p56, %p57
    %s59 = ssub.s32 %s18, %s30
    %p60 = scmp.eq.s32.totalorder %s59, 0
    %s62 = sadd.s32 %s61, 1
    %s63 = scalar_select %p60, %s61, %s62
    %p66 = pneg %p60
    %p67 = scmp.eq.s32.totalorder %s11, 3
    %p68 = por %p66, %p67
    %p69 = scmp.ne.s32.totalorder %s61, %s64
    %p70 = scmp.eq.s32.totalorder %s11, 0
    %p71 = por %p69, %p70
    %p72 = scmp.ne.s32.totalorder %s61, %s64
    %p73 = scmp.eq.s32.totalorder %s16, 3
    %p74 = por %p72, %p73
    %p75 = scmp.ne.s32.totalorder %s64, %s65
    %p76 = scmp.eq.s32.totalorder %s16, 0
    %p77 = por %p75, %p76
    %p78 = scmp.ne.s32.totalorder %s64, %s65
    %p79 = scmp.eq.s32.totalorder %s17, 3
    %p80 = por %p78, %p79
    %p82 = scmp.ne.s32.totalorder %s65, %s81
    %p83 = scmp.eq.s32.totalorder %s17, 0
    %p84 = por %p82, %p83
    %s85 = ssub.s32 %s18, %s30
    %p86 = scmp.eq.s32.totalorder %s85, 0
    %s88 = sadd.s32 %s87, 1
    %s89 = scalar_select %p86, %s87, %s88
    %p92 = pneg %p86
    %p93 = scmp.eq.s32.totalorder %s11, 3
    %p94 = por %p92, %p93
    %p95 = scmp.ne.s32.totalorder %s87, %s90
    %p96 = scmp.eq.s32.totalorder %s11, 0
    %p97 = por %p95, %p96
    %p98 = scmp.ne.s32.totalorder %s87, %s90
    %p99 = scmp.eq.s32.totalorder %s16, 3
    %p100 = por %p98, %p99
    %p101 = scmp.ne.s32.totalorder %s90, %s91
    %p102 = scmp.eq.s32.totalorder %s16, 0
    %p103 = por %p101, %p102
    %p104 = scmp.ne.s32.totalorder %s90, %s91
    %p105 = scmp.eq.s32.totalorder %s17, 3
    %p106 = por %p104, %p105
    %p108 = scmp.ne.s32.totalorder %s91, %s107
    %p109 = scmp.eq.s32.totalorder %s17, 0
    %p110 = por %p108, %p109
    %s111 = ssub.s32 %s18, %s30
    %p112 = scmp.eq.s32.totalorder %s111, 0
    %s114 = sadd.s32 %s113, 1
    %s115 = scalar_select %p112, %s113, %s114
    %p118 = pneg %p112
    %p119 = scmp.eq.s32.totalorder %s11, 3
    %p120 = por %p118, %p119
    %p121 = scmp.ne.s32.totalorder %s113, %s116
    %p122 = scmp.eq.s32.totalorder %s11, 0
    %p123 = por %p121, %p122
    %p124 = scmp.ne.s32.totalorder %s113, %s116
    %p125 = scmp.eq.s32.totalorder %s16, 3
    %p126 = por %p124, %p125
    %p127 = scmp.ne.s32.totalorder %s116, %s117
    %p128 = scmp.eq.s32.totalorder %s16, 0
    %p129 = por %p127, %p128
    %p130 = scmp.ne.s32.totalorder %s116, %s117
    %p131 = scmp.eq.s32.totalorder %s17, 3
    %p132 = por %p130, %p131
    %p134 = scmp.ne.s32.totalorder %s117, %s133
    %p135 = scmp.eq.s32.totalorder %s17, 0
    %p136 = por %p134, %p135
    %s137 = ssub.s32 %s18, %s30
    %p138 = scmp.eq.s32.totalorder %s137, 0
    %s140 = sadd.s32 %s139, 1
    %s141 = scalar_select %p138, %s139, %s140
    %p144 = pneg %p138
    %p145 = scmp.eq.s32.totalorder %s11, 3
    %p146 = por %p144, %p145
    %p147 = scmp.ne.s32.totalorder %s139, %s142
    %p148 = scmp.eq.s32.totalorder %s11, 0
    %p149 = por %p147, %p148
    %p150 = scmp.ne.s32.totalorder %s139, %s142
    %p151 = scmp.eq.s32.totalorder %s16, 3
    %p152 = por %p150, %p151
    %p153 = scmp.ne.s32.totalorder %s142, %s143
    %p154 = scmp.eq.s32.totalorder %s16, 0
    %p155 = por %p153, %p154
    %p156 = scmp.ne.s32.totalorder %s142, %s143
    %p157 = scmp.eq.s32.totalorder %s17, 3
    %p158 = por %p156, %p157
    %p160 = scmp.ne.s32.totalorder %s143, %s159
    %p161 = scmp.eq.s32.totalorder %s17, 0
    %p162 = por %p160, %p161
    %p163 = scmp.le.s32.totalorder 1, %s11
    %p164 = scmp.lt.s32.totalorder %s11, 5
    %p165 = pnand %p163, %p164
    %p166 = pneg %p165
    // Predicated region
    $region9: #{tpu_custom_call.1} parent=5 // pred_check
      _
    $region10: #{tpu_custom_call.1} parent=5 // pred_check_branch
      %168 = sbr.rel (%p165) target = $region12
    $region11: #{tpu_custom_call.1} parent=5 // pred_region
      %s169 = ssub.s32 %s11, 1
    $region12: #{tpu_custom_call.1} parent=5 // pred_fallthru
      _
    %p170 = scmp.lt.s32.totalorder %s11, 4
    // Predicated region
    $region13: #{tpu_custom_call.1} parent=5 // pred_check
      %p171 = pneg %p170
    $region14: #{tpu_custom_call.1} parent=5 // pred_check_branch
      %173 = sbr.rel (%p171) target = $region16
    $region15: #{tpu_custom_call.1} parent=5 // pred_region
      // Predicated region
      $region17: #{tpu_custom_call.1} parent=15 // pred_check
        %p174 = pneg %p45
      $region18: #{tpu_custom_call.1} parent=15 // pred_check_branch
        %176 = sbr.rel (%p174) target = $region20
      $region19: #{tpu_custom_call.1} parent=15 // pred_region
        %p177 = scmp.lt.s32.totalorder %s18, 1
        %s178 = scalar_select %p177, %s18, 1
        %p179 = scmp.lt.s32.totalorder %s19, 1
        %s180 = scalar_select %p179, %s19, 1
        %s181 = smul.addr %s178, 2
        %s182 = sadd.s32 %s180, %s181
        %s183 = smul.addr %s182, 8
        %s184 = scalar_lea.vmem %s0, %s183
      $region20: #{tpu_custom_call.1} parent=15 // pred_fallthru
        _
      // Predicated region
      $region21: #{tpu_custom_call.1} parent=15 // pred_check
        %p185 = pneg %p71
      $region22: #{tpu_custom_call.1} parent=15 // pred_check_branch
        %187 = sbr.rel (%p185) target = $region24
      $region23: #{tpu_custom_call.1} parent=15 // pred_region
        %p188 = scmp.lt.s32.totalorder %s18, 1
        %s189 = scalar_select %p188, %s18, 1
        %s190 = smul.addr %s189, 8
        %s191 = scalar_lea.vmem %s1, %s190
      $region24: #{tpu_custom_call.1} parent=15 // pred_fallthru
        _
      // Predicated region
      $region25: #{tpu_custom_call.1} parent=15 // pred_check
        %p192 = pneg %p97
      $region26: #{tpu_custom_call.1} parent=15 // pred_check_branch
        %194 = sbr.rel (%p192) target = $region28
      $region27: #{tpu_custom_call.1} parent=15 // pred_region
        %p195 = scmp.lt.s32.totalorder %s18, 1
        %s196 = scalar_select %p195, %s18, 1
        %s197 = smul.addr %s196, 8
        %s198 = scalar_lea.vmem %s2, %s197
      $region28: #{tpu_custom_call.1} parent=15 // pred_fallthru
        _
    $region16: #{tpu_custom_call.1} parent=5 // pred_fallthru
      _
    %p199 = scmp.le.s32.totalorder 1, %s11
    %p200 = scmp.lt.s32.totalorder %s11, 5
    %p201 = pnand %p199, %p200
    %p202 = pneg %p201
    // Predicated region
    $region29: #{tpu_custom_call.1} parent=5 // pred_check
      _
    $region30: #{tpu_custom_call.1} parent=5 // pred_check_branch
      %204 = sbr.rel (%p201) target = $region32
    $region31: #{tpu_custom_call.1} parent=5 // pred_region
      %s205 = ssub.s32 %s11, 1
      %p206 = scmp.lt.s32.totalorder %s20, 1
      %s207 = scalar_select %p206, %s20, 1
      %p208 = scmp.lt.s32.totalorder %s21, 1
      %s209 = scalar_select %p208, %s21, 1
      %s210 = smul.addr %s207, 2
      %s211 = sadd.s32 %s209, %s210
      %s212 = smul.addr %s211, 8
      %s213 = scalar_lea.vmem %s0, %s212
      %p214 = pneg %p51
      %p215 = pneg %p48
      %p216 = scmp.lt.s32.totalorder %s20, 1
      %s217 = scalar_select %p216, %s20, 1
      %s218 = smul.addr %s217, 8
      %s219 = scalar_lea.vmem %s1, %s218
      %p220 = pneg %p77
      %p221 = pneg %p74
      %p222 = scmp.lt.s32.totalorder %s20, 1
      %s223 = scalar_select %p222, %s20, 1
      %s224 = smul.addr %s223, 8
      %s225 = scalar_lea.vmem %s2, %s224
      %p226 = pneg %p103
      %p227 = pneg %p100
      %p228 = pneg %p129
      %p229 = pneg %p126
      %p230 = scmp.lt.s32.totalorder %s20, 1
      %s231 = scalar_select %p230, %s20, 1
      %s232 = scalar_lea.vmem %s3, %s231
      %p233 = pneg %p155
      %p234 = pneg %p152
      %p235 = scmp.lt.s32.totalorder %s20, 1
      %s236 = scalar_select %p235, %s20, 1
      %s237 = scalar_lea.vmem %s4, %s236
      %p238 = scmp.lt.s32.totalorder %s20, 1
      %s239 = scalar_select %p238, %s20, 1
      %p240 = scmp.lt.s32.totalorder %s21, 1
      %s241 = scalar_select %p240, %s21, 1
      %s242 = smul.addr %s239, 2
      %s243 = sadd.s32 %s241, %s242
      %s244 = smul.addr %s243, 8
      %s245 = scalar_lea.vmem %s0, %s244
      %p246 = scmp.lt.s32.totalorder %s20, 1
      %s247 = scalar_select %p246, %s20, 1
      %s248 = smul.addr %s247, 8
      %s249 = scalar_lea.vmem %s1, %s248
      %p250 = scmp.lt.s32.totalorder %s20, 1
      %s251 = scalar_select %p250, %s20, 1
      %s252 = smul.addr %s251, 8
      %s253 = scalar_lea.vmem %s2, %s252
      %p254 = scmp.lt.s32.totalorder %s20, 1
      %s255 = scalar_select %p254, %s20, 1
      %s256 = scalar_lea.vmem %s3, %s255
      %p257 = scmp.lt.s32.totalorder %s20, 1
      %s258 = scalar_select %p257, %s20, 1
      %s259 = scalar_lea.vmem %s4, %s258
      %p260 = scmp.eq.s32.totalorder %s21, 0
      // Predicated region
      $region33: #{tpu_custom_call.1} parent=31 // pred_check
        %p261 = pneg %p260
      $region34: #{tpu_custom_call.1} parent=31 // pred_check_branch
        %263 = sbr.rel (%p261) target = $region36
      $region35: #{tpu_custom_call.1} parent=31 // pred_region
        %vm264 = vcmask 7168
        %265 = vst.msk [vmem:[#allocation2] sm:$0xff] %vm264, -inf
        %266 = vst.msk [vmem:[#allocation3] sm:$0xff] %vm264, 0.0
        %267 = vst.msk [vmem:[#allocation4] sm:$0xff] %vm264, 0.0
        %268 = vst.msk [vmem:[#allocation5] sm:$0xff] %vm264, 0.0
      $region36: #{tpu_custom_call.1} parent=31 // pred_fallthru
        _
      %v269 = vld [vmem:[%s245] sm:$0xff]
      %v270 = vld [vmem:[#allocation2] sm:$0xff]
      %271 = vmax.xlane.f32.xlu0 %v269
      %v272 = vpop.xlane.xlu0 %271
      %v273 = vmax.f32 %v270, %v272
      %v274 = vsub.f32 %v270, %v273
      %v275 = vmul.f32 %v274, 1.442695
      %v276 = vpow.pop %v275
      %v277 = vld [vmem:[#allocation3] sm:$0xff]
      %v278 = vmul.f32 %v276, %v277
      %280 = vset.pattern.permute.xlu0 0
      %281 = vperm.xlu0 %280, %v273
      %v282 = vpop.permute.xlu0 %281
      %v284 = vsub.f32 %v269, %v282
      %v285 = vmul.f32 %v284, 1.442695
      %v286 = vpow.pop %v285
      %287 = vadd.xlane.f32.xlu0 %v286
      %v288 = vpop.xlane.xlu0 %287
      %v289 = vadd.f32 %v278, %v288
      %vm290 = vcmask 7168
      %291 = vst.msk [vmem:[#allocation3] sm:$0xff] %vm290, %v289
      %292 = vst.msk [vmem:[#allocation2] sm:$0xff] %vm290, %v273
      %v293 = vld [vmem:[#allocation4] sm:$0xff]
      %294 = vadd.xlane.f32.xlu0 %v269
      %v295 = vpop.xlane.xlu0 %294
      %v296 = vadd.f32 %v293, %v295
      %297 = vst.msk [vmem:[#allocation4] sm:$0xff] %vm290, %v296
      %s298 = smul.u32 %s21, 128
      %v299 = vlaneseq
      %v300 = vand.u32 %v299, 127
      %v301 = vstv %s298
      %v302 = vadd.s32 %v301, %v300
      %v303 = vld [vmem:[%s249] sm:$0xff]
      %304 = vset.pattern.permute.xlu0 0
      %305 = vperm.xlu0 %304, %v303
      %v306 = vpop.permute.xlu0 %305
      %vm307 = vcmp.eq.s32.totalorder %v302, %v306
      %v308 = vld [vmem:[#allocation5] sm:$0xff]
      %v309 = vsel %vm307, %v269, 0.0
      %310 = vadd.xlane.f32.xlu0 %v309
      %v311 = vpop.xlane.xlu0 %310
      %v312 = vadd.f32 %v308, %v311
      %313 = vst.msk [vmem:[#allocation5] sm:$0xff] %vm290, %v312
      %p314 = scmp.eq.s32.totalorder %s21, 1
      // Predicated region
      $region37: #{tpu_custom_call.1} parent=31 // pred_check
        %p315 = pneg %p314
      $region38: #{tpu_custom_call.1} parent=31 // pred_check_branch
        %317 = sbr.rel (%p315) target = $region40
      $region39: #{tpu_custom_call.1} parent=31 // pred_region
        %v318 = vld [vmem:[#allocation2] sm:$0xff]
        %v319 = vld [vmem:[#allocation3] sm:$0xff]
        %v320 = vlog2.pop %v319
        %v321 = vmul.f32 %v320, 0.6931472
        %v322 = vadd.f32 %v318, %v321
        %v323 = vld [vmem:[#allocation4] sm:$0xff]
        %v324 = vmul.f32 %v322, 256.0
        %v325 = vsub.f32 %v323, %v324
        %v326 = vld [vmem:[#allocation5] sm:$0xff]
        %v327 = vsub.f32 %v326, %v322
        %v328 = vld [vmem:[%s253] sm:$0xff]
        %v329 = vmul.f32 %v325, 0.00039215686
        %v330 = vmul.f32 %v327, 0.89960784
        %v331 = vadd.f32 %v329, %v330
        %v332 = vsub.f32 0.0, %v331
        %v333 = vmul.f32 %v332, %v328
        %s334 = smul.u32 %s20, 8
        %v335 = vlaneseq
        %v336 = vshrl.u32 %v335, 7
        %v337 = vstv %s334
        %v338 = vadd.s32 %v337, %v336
        %vm339 = vcmp.lt.s32.totalorder %v338, 12
        %v340 = vsel %vm339, %v333, 0.0
        %v341 = vsel %vm290, %v340, 0.0
        %342 = vadd.xlane.f32.xlu0 %v341
        %v343 = vpop.xlane.xlu0 %342
        %v344 = vrot.slane %v343, 4
        %v345 = vadd.f32 %v343, %v344
        %v346 = vrot.slane %v345, 2
        %v347 = vadd.f32 %v345, %v346
        %v348 = vrot.slane %v347, 1
        %v349 = vadd.f32 %v347, %v348
        %s350 = vtos %v349
        %v351 = vstv %s350
        %vm352 = vcmask 0
        %353 = vst.msk [vmem:[%s256] sm:$0x1] %vm352, %v351
        %v354 = vsel %vm339, %v328, 0.0
        %v355 = vsel %vm290, %v354, 0.0
        %356 = vadd.xlane.f32.xlu0 %v355
        %v357 = vpop.xlane.xlu0 %356
        %v358 = vrot.slane %v357, 4
        %v359 = vadd.f32 %v357, %v358
        %v360 = vrot.slane %v359, 2
        %v361 = vadd.f32 %v359, %v360
        %v362 = vrot.slane %v361, 1
        %v363 = vadd.f32 %v361, %v362
        %s364 = vtos %v363
        %v365 = vstv %s364
        %366 = vst.msk [vmem:[%s259] sm:$0x1] %vm352, %v365
      $region40: #{tpu_custom_call.1} parent=31 // pred_fallthru
        _
      %p367 = scmp.lt.s32.totalorder %s20, 1
      %s368 = scalar_select %p367, %s20, 1
      %s369 = scalar_lea.vmem %s3, %s368
      %p370 = scmp.lt.s32.totalorder %s20, 1
      %s371 = scalar_select %p370, %s20, 1
      %s372 = scalar_lea.vmem %s4, %s371
      // Predicated region
      $region41: #{tpu_custom_call.1} parent=31 // pred_check
        %p373 = pneg %p126
      $region42: #{tpu_custom_call.1} parent=31 // pred_check_branch
        %375 = sbr.rel (%p373) target = $region44
      $region43: #{tpu_custom_call.1} parent=31 // pred_region
        _
      $region44: #{tpu_custom_call.1} parent=31 // pred_fallthru
        _
      // Predicated region
      $region45: #{tpu_custom_call.1} parent=31 // pred_check
        %p376 = pneg %p152
      $region46: #{tpu_custom_call.1} parent=31 // pred_check_branch
        %378 = sbr.rel (%p376) target = $region48
      $region47: #{tpu_custom_call.1} parent=31 // pred_region
        _
      $region48: #{tpu_custom_call.1} parent=31 // pred_fallthru
        _
    $region32: #{tpu_custom_call.1} parent=5 // pred_fallthru
      _
    %p379 = scmp.le.s32.totalorder 2, %s11
    // Predicated region
    $region49: #{tpu_custom_call.1} parent=5 // pred_check
      %p380 = pneg %p379
    $region50: #{tpu_custom_call.1} parent=5 // pred_check_branch
      %382 = sbr.rel (%p380) target = $region52
    $region51: #{tpu_custom_call.1} parent=5 // pred_region
      %s383 = ssub.s32 %s11, 2
      // Predicated region
      $region53: #{tpu_custom_call.1} parent=51 // pred_check
        %p384 = pneg %p132
      $region54: #{tpu_custom_call.1} parent=51 // pred_check_branch
        %386 = sbr.rel (%p384) target = $region56
      $region55: #{tpu_custom_call.1} parent=51 // pred_region
        %p387 = scmp.lt.s32.totalorder %s22, 1
        %s388 = scalar_select %p387, %s22, 1
        %s389 = scalar_lea.vmem %s3, %s388
      $region56: #{tpu_custom_call.1} parent=51 // pred_fallthru
        _
      // Predicated region
      $region57: #{tpu_custom_call.1} parent=51 // pred_check
        %p390 = pneg %p158
      $region58: #{tpu_custom_call.1} parent=51 // pred_check_branch
        %392 = sbr.rel (%p390) target = $region60
      $region59: #{tpu_custom_call.1} parent=51 // pred_region
        %p393 = scmp.lt.s32.totalorder %s22, 1
        %s394 = scalar_select %p393, %s22, 1
        %s395 = scalar_lea.vmem %s4, %s394
      $region60: #{tpu_custom_call.1} parent=51 // pred_fallthru
        _
    $region52: #{tpu_custom_call.1} parent=5 // pred_fallthru
      _
  $region6: #{tpu_custom_call.1} parent=0 // loop_footer
    %s15 = sadd.s32 1, %s11
  $region7: #{tpu_custom_call.1} parent=0 // loop_footer_branch
    %10 = sbr.rel target = $region3
  $region8: #{tpu_custom_call.1} parent=0 // loop_exit
    _

</llo_original>
